<compile_context>
chip_gen: v7x
topology: tpu7x:2x2x1
jax: 0.10.0
libtpu: 0.0.40
codegen_flags: <defaults>
</compile_context>

<pallas_src>
import functools

import jax
import jax.numpy as jnp
from jax.experimental import pallas as pl
from jax.experimental.pallas import tpu as pltpu


def _sensory_update_kernel(p_ref, w_ref, b_ref, h_ref, out_ref, *, sdim):
    """Fused conv-as-matmul + sensory (GRU-style) update for one (batch*object).

    p_ref  : (1, 9*Cin, HW)  bf16   im2col patches (channels-first, lanes = HW)
    w_ref  : (Cout, 9*Cin)   bf16   conv weight as a matrix, Cout = 3*sdim
    b_ref  : (Cout, 1)       f32    conv bias
    h_ref  : (1, sdim, HW)   f32    previous sensory state
    out_ref: (1, sdim, HW)   f32    new sensory state
    """
    # bf16 x bf16 -> f32 accumulation on the MXU; output lane dim = HW (dense).
    acc = jnp.dot(w_ref[...], p_ref[0], preferred_element_type=jnp.float32)
    acc = acc + b_ref[...]                              # (Cout, HW), lane broadcast

    # Sublane-aligned row slices (offsets 0, sdim, 2*sdim are multiples of 8).
    forget_gate = jax.nn.sigmoid(acc[:sdim])
    update_gate = jax.nn.sigmoid(acc[sdim:2 * sdim])
    new_value = jnp.tanh(acc[2 * sdim:])

    h = h_ref[0]
    out_ref[0] = forget_gate * h * (1.0 - update_gate) + update_gate * new_value


def sensory_deep_updater_forward(f, h, weight, bias):
    """f: (B, N, f_dim, H, W), h: (B, N, sensory_dim, H, W) -> new_h like h."""
    B, N, f_dim, H, W = f.shape
    sdim = h.shape[2]
    Cin = f_dim + sdim
    Cout = 3 * sdim
    BN = B * N
    HW = H * W
    # TODO(synk): pad HW up to a multiple of 128 for arbitrary resolutions.
    assert HW % 128 == 0, "demo assumes H*W is a multiple of 128"

    # torch.cat([f, h], dim=2) then GConv2D flattens (B, N) -> B*N.
    x = jnp.concatenate([f, h], axis=2).reshape(BN, Cin, H, W).astype(jnp.float32)
    x_pad = jnp.pad(x, ((0, 0), (0, 0), (1, 1), (1, 1)))       # conv padding=1

    # channels-first im2col: patches[:, (kh*3+kw)*Cin + i, p] = x_pad[:, i, kh+r, kw+c]
    taps = [x_pad[:, :, kh:kh + H, kw:kw + W].reshape(BN, Cin, HW)
            for kh in range(3) for kw in range(3)]
    patches = jnp.concatenate(taps, axis=1).astype(jnp.bfloat16)    # (BN, 9*Cin, HW)

    # OIHW -> (Cout, 9*Cin), tap-major / channel-minor to match the patch layout.
    wmat = jnp.transpose(weight, (0, 2, 3, 1)).reshape(Cout, 9 * Cin)
    wmat = wmat.astype(jnp.bfloat16)
    bvec = bias.reshape(Cout, 1).astype(jnp.float32)

    h_flat = h.reshape(BN, sdim, HW).astype(jnp.float32)

    new_h = pl.pallas_call(
        functools.partial(_sensory_update_kernel, sdim=sdim),
        out_shape=jax.ShapeDtypeStruct((BN, sdim, HW), jnp.float32),
        grid=(BN,),
        in_specs=[
            pl.BlockSpec((1, 9 * Cin, HW), lambda b: (b, 0, 0)),
            pl.BlockSpec((Cout, 9 * Cin), lambda b: (0, 0)),
            pl.BlockSpec((Cout, 1), lambda b: (0, 0)),
            pl.BlockSpec((1, sdim, HW), lambda b: (b, 0, 0)),
        ],
        out_specs=pl.BlockSpec((1, sdim, HW), lambda b: (b, 0, 0)),
        # v7x: shards the BN axis over both TensorCores; on v5e/v6e this is a
        # short serial loop whose per-step overhead is negligible at this size.
        compiler_params=pltpu.CompilerParams(dimension_semantics=("parallel",)),
    )(patches, wmat, bvec, h_flat)

    return new_h.reshape(B, N, sdim, H, W)


def init_params(f_dim, sensory_dim, seed=0):
    """Matches the module: xavier_normal_ weight, Conv2d-default bias."""
    Cin = f_dim + sensory_dim
    Cout = 3 * sensory_dim
    k1, k2 = jax.random.split(jax.random.PRNGKey(seed))
    fan_in, fan_out = Cin * 9, Cout * 9
    std = (2.0 / (fan_in + fan_out)) ** 0.5
    weight = std * jax.random.normal(k1, (Cout, Cin, 3, 3), jnp.float32)
    bound = 1.0 / (fan_in ** 0.5)
    bias = jax.random.uniform(k2, (Cout,), jnp.float32, -bound, bound)
    return weight, bias


def _ref_forward(f, h, weight, bias, *, quantize_inputs=False):
    """Plain-JAX reference of the PyTorch forward (f32 conv + gates)."""
    B, N, f_dim, H, W = f.shape
    sdim = h.shape[2]
    x = jnp.concatenate([f, h], axis=2).reshape(B * N, f_dim + sdim, H, W)
    x = x.astype(jnp.float32)
    w = weight
    if quantize_inputs:  # emulate bf16 MXU inputs (products exact, f32 accumulate)
        x = x.astype(jnp.bfloat16).astype(jnp.float32)
        w = w.astype(jnp.bfloat16).astype(jnp.float32)
    values = jax.lax.conv_general_dilated(
        x, w, window_strides=(1, 1), padding=((1, 1), (1, 1)),
        dimension_numbers=("NCHW", "OIHW", "NCHW"))
    values = values + bias[None, :, None, None]
    values = values.reshape(B, N, 3 * sdim, H, W)
    forget = jax.nn.sigmoid(values[:, :, :sdim])
    update = jax.nn.sigmoid(values[:, :, sdim:2 * sdim])
    new_v = jnp.tanh(values[:, :, 2 * sdim:])
    return forget * h * (1.0 - update) + update * new_v


if __name__ == "__main__":
    B, N, f_dim, sensory_dim, H, W = 2, 2, 16, 16, 16, 16

    weight, bias = init_params(f_dim, sensory_dim, seed=0)
    kf, kh = jax.random.split(jax.random.PRNGKey(0))
    f = jax.random.normal(kf, (B, N, f_dim, H, W), jnp.float32)
    h = jax.random.normal(kh, (B, N, sensory_dim, H, W), jnp.float32)

    new_h = sensory_deep_updater_forward(f, h, weight, bias)
    jax.block_until_ready(new_h)
    assert new_h.shape == (B, N, sensory_dim, H, W)

    # Kernel-math check: reference on bf16-rounded inputs (same math as the
    # MXU bf16 x bf16 -> f32-accumulate path) must match tightly.
    ref_q = _ref_forward(f, h, weight, bias, quantize_inputs=True)
    assert jnp.allclose(new_h, ref_q, atol=2e-3, rtol=2e-3), \
        float(jnp.max(jnp.abs(new_h - ref_q)))

    # End-to-end check vs the full-f32 module semantics (bf16 quantization slack).
    ref = _ref_forward(f, h, weight, bias, quantize_inputs=False)
    assert jnp.allclose(new_h, ref, atol=5e-2, rtol=5e-2), \
        float(jnp.max(jnp.abs(new_h - ref)))

    print("KERNEL_OK")
</pallas_src>

<mosaic_0001>
module attributes {stable_mosaic.version = 11 : i64} {
  func.func @_sensory_update_kernel(%arg0: i32, %arg1: memref<1x288x256xbf16, #tpu.memory_space<vmem>>, %arg2: memref<48x288xbf16, #tpu.memory_space<vmem>>, %arg3: memref<48x1xf32, #tpu.memory_space<vmem>>, %arg4: memref<1x16x256xf32, #tpu.memory_space<vmem>>, %arg5: memref<1x16x256xf32, #tpu.memory_space<vmem>>) attributes {dimension_semantics = [#tpu.dimension_semantics<parallel>], iteration_bounds = array<i64: 4>, scalar_prefetch = 0 : i64, scratch_operands = 0 : i64, tpu.core_type = #tpu.core_type<tc>, window_params = [{transform_indices = @transform_0, window_bounds = array<i64: 1, 288, 256>}, {pipeline_mode = #tpu.pipeline_mode<synchronous>, transform_indices = @transform_1, window_bounds = array<i64: 48, 288>}, {pipeline_mode = #tpu.pipeline_mode<synchronous>, transform_indices = @transform_2, window_bounds = array<i64: 48, 1>}, {transform_indices = @transform_3, window_bounds = array<i64: 1, 16, 256>}, {transform_indices = @transform_4, window_bounds = array<i64: 1, 16, 256>}]} {
    %c0 = arith.constant 0 : index
    %c0_0 = arith.constant 0 : index
    %0 = vector.load %arg2[%c0, %c0_0] : memref<48x288xbf16, #tpu.memory_space<vmem>>, vector<48x288xbf16>
    %c0_1 = arith.constant 0 : index
    %c0_2 = arith.constant 0 : index
    %c0_3 = arith.constant 0 : index
    %1 = vector.load %arg1[%c0_1, %c0_2, %c0_3] : memref<1x288x256xbf16, #tpu.memory_space<vmem>>, vector<1x288x256xbf16>
    %2 = vector.shape_cast %1 : vector<1x288x256xbf16> to vector<288x256xbf16>
    %cst = arith.constant dense<0.000000e+00> : vector<48x256xf32>
    %3 = tpu.matmul %0, %2, %cst {dimension_numbers = #tpu.dot_dimension_numbers<[1], [0], [0], [1], [0, 0, 1, 1], [], []>} : vector<48x288xbf16>, vector<288x256xbf16>, vector<48x256xf32> -> vector<48x256xf32>
    %c0_4 = arith.constant 0 : index
    %c0_5 = arith.constant 0 : index
    %4 = vector.load %arg3[%c0_4, %c0_5] : memref<48x1xf32, #tpu.memory_space<vmem>>, vector<48x1xf32>
    %5 = vector.broadcast %4 : vector<48x1xf32> to vector<48x256xf32>
    %6 = arith.addf %3, %5 : vector<48x256xf32>
    %7 = vector.extract_strided_slice %6 {offsets = [0, 0], sizes = [16, 256], strides = [1, 1]} : vector<48x256xf32> to vector<16x256xf32>
    %8 = arith.negf %7 : vector<16x256xf32>
    %9 = math.exp %8 : vector<16x256xf32>
    %cst_6 = arith.constant 1.000000e+00 : f32
    %10 = vector.broadcast %cst_6 : f32 to vector<16x256xf32>
    %11 = arith.addf %10, %9 : vector<16x256xf32>
    %12 = arith.divf %10, %11 : vector<16x256xf32>
    %13 = vector.extract_strided_slice %6 {offsets = [16, 0], sizes = [16, 256], strides = [1, 1]} : vector<48x256xf32> to vector<16x256xf32>
    %14 = arith.negf %13 : vector<16x256xf32>
    %15 = math.exp %14 : vector<16x256xf32>
    %cst_7 = arith.constant 1.000000e+00 : f32
    %16 = vector.broadcast %cst_7 : f32 to vector<16x256xf32>
    %17 = arith.addf %16, %15 : vector<16x256xf32>
    %18 = arith.divf %16, %17 : vector<16x256xf32>
    %19 = vector.extract_strided_slice %6 {offsets = [32, 0], sizes = [16, 256], strides = [1, 1]} : vector<48x256xf32> to vector<16x256xf32>
    %20 = math.tanh %19 : vector<16x256xf32>
    %c0_8 = arith.constant 0 : index
    %c0_9 = arith.constant 0 : index
    %c0_10 = arith.constant 0 : index
    %21 = vector.load %arg4[%c0_8, %c0_9, %c0_10] : memref<1x16x256xf32, #tpu.memory_space<vmem>>, vector<1x16x256xf32>
    %22 = vector.shape_cast %21 : vector<1x16x256xf32> to vector<16x256xf32>
    %23 = arith.mulf %12, %22 : vector<16x256xf32>
    %cst_11 = arith.constant 1.000000e+00 : f32
    %24 = vector.broadcast %cst_11 : f32 to vector<16x256xf32>
    %25 = arith.subf %24, %18 : vector<16x256xf32>
    %26 = arith.mulf %23, %25 : vector<16x256xf32>
    %27 = arith.mulf %18, %20 : vector<16x256xf32>
    %28 = arith.addf %26, %27 : vector<16x256xf32>
    %c0_12 = arith.constant 0 : index
    %c0_13 = arith.constant 0 : index
    %c0_14 = arith.constant 0 : index
    %29 = vector.load %arg5[%c0_12, %c0_13, %c0_14] : memref<1x16x256xf32, #tpu.memory_space<vmem>>, vector<1x16x256xf32>
    %30 = vector.shape_cast %29 : vector<1x16x256xf32> to vector<16x256xf32>
    %31 = vector.shape_cast %28 : vector<16x256xf32> to vector<1x16x256xf32>
    tpu.vector_store %arg5[%c0_12, %c0_13, %c0_14], %31 {strides = array<i32>} : memref<1x16x256xf32, #tpu.memory_space<vmem>>, vector<1x16x256xf32>,
    return
  }
  func.func @transform_0(%arg0: i32) -> (i32, i32, i32) {
    %c0_i32 = arith.constant 0 : i32
    %c0_i32_0 = arith.constant 0 : i32
    %c0_i32_1 = arith.constant 0 : i32
    return %arg0, %c0_i32, %c0_i32_0 : i32, i32, i32
  }
  func.func @transform_1(%arg0: i32) -> (i32, i32) {
    %c0_i32 = arith.constant 0 : i32
    %c0_i32_0 = arith.constant 0 : i32
    %c0_i32_1 = arith.constant 0 : i32
    return %c0_i32, %c0_i32_0 : i32, i32
  }
  func.func @transform_2(%arg0: i32) -> (i32, i32) {
    %c0_i32 = arith.constant 0 : i32
    %c0_i32_0 = arith.constant 0 : i32
    %c0_i32_1 = arith.constant 0 : i32
    return %c0_i32, %c0_i32_0 : i32, i32
  }
  func.func @transform_3(%arg0: i32) -> (i32, i32, i32) {
    %c0_i32 = arith.constant 0 : i32
    %c0_i32_0 = arith.constant 0 : i32
    %c0_i32_1 = arith.constant 0 : i32
    return %arg0, %c0_i32, %c0_i32_0 : i32, i32, i32
  }
  func.func @transform_4(%arg0: i32) -> (i32, i32, i32) {
    %c0_i32 = arith.constant 0 : i32
    %c0_i32_0 = arith.constant 0 : i32
    %c0_i32_1 = arith.constant 0 : i32
    return %arg0, %c0_i32, %c0_i32_0 : i32, i32, i32
  }
}

</mosaic_0001>

<llo_original>
// kernel: tpu_custom_call.1
$region0: #{tpu_custom_call.1}
  #allocation0 [shape = 'u32[]', space=smem, size = 0x4, offset = 0x4, fixed_abs, tag = 'smem constant byte address 0x4 - core index']
  #allocation1 [shape = 'u32[144,128]{1,0:T(1,128)}', space=vmem, size = 0x12000, scoped, tag = 'internal scratch']
  %s0 = inlined_call_operand.hbm [shape: bf16[4,288,256], index: 0, kind: input, shape index: {}]
  %s1 = inlined_call_operand.hbm [shape: bf16[48,288], index: 1, kind: input, shape index: {}]
  %s2 = inlined_call_operand.vmem [shape: f32[48,1], index: 2, kind: input, shape index: {}]
  %s3 = inlined_call_operand.hbm [shape: f32[4,16,256], index: 3, kind: input, shape index: {}]
  %s4 = inlined_call_operand.hbm [shape: f32[4,16,256], index: 4, kind: output, shape index: {}]
  %s5 = sld [smem:[#allocation0]]
  $region61: #{tpu_custom_call.1} parent=0
    _
  %s7 = ssub.s32 1, %s5
  %s8 = scalar_select 0, %s7, %s5
  $region1: #{tpu_custom_call.1} parent=0
    #allocation2 [shape = 'u8[294912]{0}', space=vmem, size = 0x48000, scoped, tag = 'input window, operand 0']
    #allocation3 [shape = 's32[2]{0}', space=sflag, size = 0x8, scoped, tag = 'scoped memory for tpu_custom_call.1']
    #allocation4 [shape = 's32[2]{0}', space=sflag, size = 0x8, scoped, tag = 'scoped memory for tpu_custom_call.1']
    #allocation5 [shape = 'u8[36864]{0}', space=vmem, size = 0x9000, scoped, tag = 'input window, operand 1, single buffered']
    #allocation6 [shape = 's32[1]{0}', space=sflag, size = 0x4, scoped, tag = 'scoped memory for tpu_custom_call.1']
    #allocation7 [shape = 'u8[32768]{0}', space=vmem, size = 0x8000, scoped, tag = 'input window, operand 3']
    #allocation8 [shape = 'u8[32768]{0}', space=vmem, size = 0x8000, scoped, tag = 'output window, operand 0']
    %9 = vsyncpa [#allocation3], 0
    %s10 = scalar_lea.sflag [#allocation3], 1
    %11 = vsyncpa %s10, 0
    %12 = vsyncpa [#allocation6], 0
    %13 = vsyncpa [#allocation4], 0
    %s14 = scalar_lea.sflag [#allocation4], 1
    %15 = vsyncpa %s14, 0
    loop: start=0, step=1, limit=6
    $region2: #{tpu_custom_call.1} parent=1 // loop_pre_header
      _
    $region3: #{tpu_custom_call.1} parent=1 // loop_header
      %s17 = sphi 0, %s21
      %p18 = scmp.ge.s32.totalorder %s17, 6
      %s27 = sphi 0, %s29
      %s30 = sphi 0, %s27
      %s31 = sphi 0, %s30
      %s47 = sphi 0, %s31
      %s51 = sphi 0, %s51
      %s53 = sphi 0, %s51
      %s54 = sphi 0, %s53
      %s68 = sphi 0, %s54
      %s72 = sphi 0, %s72
      %s74 = sphi 0, %s72
      %s75 = sphi 0, %s74
      %s89 = sphi 0, %s75
      %s95 = sphi 0, %s97
      %s98 = sphi 0, %s95
      %s99 = sphi 0, %s98
      %s115 = sphi 0, %s99
      %s121 = sphi 0, %s123
      %s124 = sphi 0, %s121
      %s125 = sphi 0, %s124
      %s141 = sphi 0, %s125
    $region4: #{tpu_custom_call.1} parent=1 // loop_header_branch
      %20 = sbr.rel (%p18) target = $region8
    $region5: #{tpu_custom_call.1} parent=1 // loop_body
      %s22 = ssub.s32 %s17, 1
      %s23 = ssub.s32 %s17, 2
      %s24 = sadd.s32 %s17, 1
      %s25 = ssub.s32 %s17, %s24
      %p26 = scmp.eq.s32.totalorder %s25, 0
      %s28 = sadd.s32 %s27, 1
      %s29 = scalar_select %p26, %s27, %s28
      %p32 = pneg %p26
      %p33 = scmp.eq.s32.totalorder %s17, 3
      %p34 = por %p32, %p33
      %p35 = scmp.ne.s32.totalorder %s27, %s30
      %p36 = scmp.eq.s32.totalorder %s17, 0
      %p37 = por %p35, %p36
      %p38 = scmp.ne.s32.totalorder %s27, %s30
      %p39 = scmp.eq.s32.totalorder %s22, 3
      %p40 = por %p38, %p39
      %p41 = scmp.ne.s32.totalorder %s30, %s31
      %p42 = scmp.eq.s32.totalorder %s22, 0
      %p43 = por %p41, %p42
      %p44 = scmp.ne.s32.totalorder %s30, %s31
      %p45 = scmp.eq.s32.totalorder %s23, 3
      %p46 = por %p44, %p45
      %p48 = scmp.ne.s32.totalorder %s31, %s47
      %p49 = scmp.eq.s32.totalorder %s23, 0
      %p50 = por %p48, %p49
      %s52 = sadd.s32 %s51, 1
      %p55 = scmp.eq.s32.totalorder %s17, 3
      %p56 = scmp.ne.s32.totalorder %s51, %s53
      %p57 = scmp.eq.s32.totalorder %s17, 0
      %p58 = por %p56, %p57
      %p59 = scmp.ne.s32.totalorder %s51, %s53
      %p60 = scmp.eq.s32.totalorder %s22, 3
      %p61 = por %p59, %p60
      %p62 = scmp.ne.s32.totalorder %s53, %s54
      %p63 = scmp.eq.s32.totalorder %s22, 0
      %p64 = por %p62, %p63
      %p65 = scmp.ne.s32.totalorder %s53, %s54
      %p66 = scmp.eq.s32.totalorder %s23, 3
      %p67 = por %p65, %p66
      %p69 = scmp.ne.s32.totalorder %s54, %s68
      %p70 = scmp.eq.s32.totalorder %s23, 0
      %p71 = por %p69, %p70
      %s73 = sadd.s32 %s72, 1
      %p76 = scmp.eq.s32.totalorder %s17, 3
      %p77 = scmp.ne.s32.totalorder %s72, %s74
      %p78 = scmp.eq.s32.totalorder %s17, 0
      %p79 = por %p77, %p78
      %p80 = scmp.ne.s32.totalorder %s72, %s74
      %p81 = scmp.eq.s32.totalorder %s22, 3
      %p82 = por %p80, %p81
      %p83 = scmp.ne.s32.totalorder %s74, %s75
      %p84 = scmp.eq.s32.totalorder %s22, 0
      %p85 = por %p83, %p84
      %p86 = scmp.ne.s32.totalorder %s74, %s75
      %p87 = scmp.eq.s32.totalorder %s23, 3
      %p88 = por %p86, %p87
      %p90 = scmp.ne.s32.totalorder %s75, %s89
      %p91 = scmp.eq.s32.totalorder %s23, 0
      %p92 = por %p90, %p91
      %s93 = ssub.s32 %s17, %s24
      %p94 = scmp.eq.s32.totalorder %s93, 0
      %s96 = sadd.s32 %s95, 1
      %s97 = scalar_select %p94, %s95, %s96
      %p100 = pneg %p94
      %p101 = scmp.eq.s32.totalorder %s17, 3
      %p102 = por %p100, %p101
      %p103 = scmp.ne.s32.totalorder %s95, %s98
      %p104 = scmp.eq.s32.totalorder %s17, 0
      %p105 = por %p103, %p104
      %p106 = scmp.ne.s32.totalorder %s95, %s98
      %p107 = scmp.eq.s32.totalorder %s22, 3
      %p108 = por %p106, %p107
      %p109 = scmp.ne.s32.totalorder %s98, %s99
      %p110 = scmp.eq.s32.totalorder %s22, 0
      %p111 = por %p109, %p110
      %p112 = scmp.ne.s32.totalorder %s98, %s99
      %p113 = scmp.eq.s32.totalorder %s23, 3
      %p114 = por %p112, %p113
      %p116 = scmp.ne.s32.totalorder %s99, %s115
      %p117 = scmp.eq.s32.totalorder %s23, 0
      %p118 = por %p116, %p117
      %s119 = ssub.s32 %s17, %s24
      %p120 = scmp.eq.s32.totalorder %s119, 0
      %s122 = sadd.s32 %s121, 1
      %s123 = scalar_select %p120, %s121, %s122
      %p126 = pneg %p120
      %p127 = scmp.eq.s32.totalorder %s17, 3
      %p128 = por %p126, %p127
      %p129 = scmp.ne.s32.totalorder %s121, %s124
      %p130 = scmp.eq.s32.totalorder %s17, 0
      %p131 = por %p129, %p130
      %p132 = scmp.ne.s32.totalorder %s121, %s124
      %p133 = scmp.eq.s32.totalorder %s22, 3
      %p134 = por %p132, %p133
      %p135 = scmp.ne.s32.totalorder %s124, %s125
      %p136 = scmp.eq.s32.totalorder %s22, 0
      %p137 = por %p135, %p136
      %p138 = scmp.ne.s32.totalorder %s124, %s125
      %p139 = scmp.eq.s32.totalorder %s23, 3
      %p140 = por %p138, %p139
      %p142 = scmp.ne.s32.totalorder %s125, %s141
      %p143 = scmp.eq.s32.totalorder %s23, 0
      %p144 = por %p142, %p143
      %p145 = scmp.le.s32.totalorder 1, %s17
      %p146 = scmp.lt.s32.totalorder %s17, 5
      %p147 = pnand %p145, %p146
      %p148 = pneg %p147
      // Predicated region
      $region9: #{tpu_custom_call.1} parent=5 // pred_check
        _
      $region10: #{tpu_custom_call.1} parent=5 // pred_check_branch
        %150 = sbr.rel (%p147) target = $region12
      $region11: #{tpu_custom_call.1} parent=5 // pred_region
        %s151 = ssub.s32 %s17, 1
        // Predicated region
        $region13: #{tpu_custom_call.1} parent=11 // pred_check
          %p152 = pneg %p64
        $region14: #{tpu_custom_call.1} parent=11 // pred_check_branch
          %154 = sbr.rel (%p152) target = $region16
        $region15: #{tpu_custom_call.1} parent=11 // pred_region
          %s156 = ssub.s32 1152, 1152
          %157 = vsyncadd [#allocation6], %s156
          %s158 = sshll.u32 [#allocation5], 4
          %s159 = int_to_ptr.vmem [resolvable:$true] %s158
          %164 = dma.hbm_to_vmem [thread:$0]  %s1, 1152, %s159, [#allocation6], 192, 192, 12
        $region16: #{tpu_custom_call.1} parent=11 // pred_fallthru
          _
        // Predicated region
        $region17: #{tpu_custom_call.1} parent=11 // pred_check
          %p165 = pneg %p85
        $region18: #{tpu_custom_call.1} parent=11 // pred_check_branch
          %167 = sbr.rel (%p165) target = $region20
        $region19: #{tpu_custom_call.1} parent=11 // pred_region
          _
        $region20: #{tpu_custom_call.1} parent=11 // pred_fallthru
          _
      $region12: #{tpu_custom_call.1} parent=5 // pred_fallthru
        _
      %p168 = scmp.lt.s32.totalorder %s17, 4
      // Predicated region
      $region21: #{tpu_custom_call.1} parent=5 // pred_check
        %p169 = pneg %p168
      $region22: #{tpu_custom_call.1} parent=5 // pred_check_branch
        %171 = sbr.rel (%p169) target = $region24
      $region23: #{tpu_custom_call.1} parent=5 // pred_region
        // Predicated region
        $region25: #{tpu_custom_call.1} parent=23 // pred_check
          %p172 = pneg %p37
        $region26: #{tpu_custom_call.1} parent=23 // pred_check_branch
          %174 = sbr.rel (%p172) target = $region28
        $region27: #{tpu_custom_call.1} parent=23 // pred_region
          %s175 = sand.u32 %s17, 1
          %s176 = scalar_lea.sflag [#allocation3], %s175
          %s177 = sand.u32 %s27, 1
          %s178 = smul.addr %s177, 288
          %s179 = scalar_lea.vmem [#allocation2], %s178
          %s181 = ssub.s32 4608, 4608
          %182 = vsyncadd %s176, %s181
          %s183 = smul.addr %s17, 72
          %s184 = smul.addr %s183, 64
          %s185 = scalar_lea.hbm %s0, %s184
          %s186 = sshll.u32 %s179, 4
          %s187 = int_to_ptr.vmem [resolvable:$true] %s186
          %192 = dma.hbm_to_vmem [thread:$0]  %s185, 4608, %s187, %s176, 128, 128, 8
        $region28: #{tpu_custom_call.1} parent=23 // pred_fallthru
          _
        // Predicated region
        $region29: #{tpu_custom_call.1} parent=23 // pred_check
          %p193 = pneg %p105
        $region30: #{tpu_custom_call.1} parent=23 // pred_check_branch
          %195 = sbr.rel (%p193) target = $region32
        $region31: #{tpu_custom_call.1} parent=23 // pred_region
          %s196 = sand.u32 %s17, 1
          %s197 = scalar_lea.sflag [#allocation3], %s196
          %s198 = sand.u32 %s95, 1
          %s199 = smul.addr %s198, 32
          %s200 = scalar_lea.vmem [#allocation7], %s199
          %s202 = ssub.s32 512, 512
          %203 = vsyncadd %s197, %s202
          %s204 = smul.addr %s17, 4
          %s205 = smul.addr %s204, 128
          %s206 = scalar_lea.hbm %s3, %s205
          %s207 = sshll.u32 %s200, 4
          %s208 = int_to_ptr.vmem [resolvable:$true] %s207
          %213 = dma.hbm_to_vmem [thread:$0]  %s206, 512, %s208, %s197, 256, 256, 16
        $region32: #{tpu_custom_call.1} parent=23 // pred_fallthru
          _
      $region24: #{tpu_custom_call.1} parent=5 // pred_fallthru
        _
      %p214 = scmp.le.s32.totalorder 1, %s17
      %p215 = scmp.lt.s32.totalorder %s17, 5
      %p216 = pnand %p214, %p215
      %p217 = pneg %p216
      // Predicated region
      $region33: #{tpu_custom_call.1} parent=5 // pred_check
        _
      $region34: #{tpu_custom_call.1} parent=5 // pred_check_branch
        %219 = sbr.rel (%p216) target = $region36
      $region35: #{tpu_custom_call.1} parent=5 // pred_region
        %s220 = ssub.s32 %s17, 1
        %s221 = sand.u32 %s22, 1
        %s222 = scalar_lea.sflag [#allocation3], %s221
        %s223 = sand.u32 %s30, 1
        %s224 = smul.addr %s223, 288
        %s225 = scalar_lea.vmem [#allocation2], %s224
        // Predicated region
        $region37: #{tpu_custom_call.1} parent=35 // pred_check
          %p226 = pneg %p43
        $region38: #{tpu_custom_call.1} parent=35 // pred_check_branch
          %228 = sbr.rel (%p226) target = $region40
        $region39: #{tpu_custom_call.1} parent=35 // pred_region
          %229 = dma.done %s222, 4608
        $region40: #{tpu_custom_call.1} parent=35 // pred_fallthru
          _
        // Predicated region
        $region41: #{tpu_custom_call.1} parent=35 // pred_check
          %p230 = pneg %p64
        $region42: #{tpu_custom_call.1} parent=35 // pred_check_branch
          %232 = sbr.rel (%p230) target = $region44
        $region43: #{tpu_custom_call.1} parent=35 // pred_region
          %233 = dma.done [#allocation6], 1152
        $region44: #{tpu_custom_call.1} parent=35 // pred_fallthru
          _
        %s234 = sand.u32 %s22, 1
        %s235 = scalar_lea.sflag [#allocation3], %s234
        %s236 = sand.u32 %s98, 1
        %s237 = smul.addr %s236, 32
        %s238 = scalar_lea.vmem [#allocation7], %s237
        // Predicated region
        $region45: #{tpu_custom_call.1} parent=35 // pred_check
          %p239 = pneg %p111
        $region46: #{tpu_custom_call.1} parent=35 // pred_check_branch
          %241 = sbr.rel (%p239) target = $region48
        $region47: #{tpu_custom_call.1} parent=35 // pred_region
          %242 = dma.done %s235, 512
        $region48: #{tpu_custom_call.1} parent=35 // pred_fallthru
          _
        %s243 = sand.u32 %s22, 1
        %s244 = scalar_lea.sflag [#allocation3], %s243
        %s245 = sand.u32 %s30, 1
        %s246 = smul.addr %s245, 288
        %s247 = scalar_lea.vmem [#allocation2], %s246
        %p248 = pneg %p43
        %p249 = pneg %p40
        %p250 = pneg %p64
        %p251 = pneg %p61
        %p252 = pneg %p85
        %p253 = pneg %p82
        %s254 = sand.u32 %s22, 1
        %s255 = scalar_lea.sflag [#allocation3], %s254
        %s256 = sand.u32 %s98, 1
        %s257 = smul.addr %s256, 32
        %s258 = scalar_lea.vmem [#allocation7], %s257
        %p259 = pneg %p111
        %p260 = pneg %p108
        %p261 = pneg %p137
        %p262 = pneg %p134
        %s263 = sand.u32 %s124, 1
        %s264 = scalar_lea.sflag [#allocation4], %s263
        %s265 = sand.u32 %s124, 1
        %s266 = smul.addr %s265, 32
        %s267 = scalar_lea.vmem [#allocation8], %s266
        %v269 = vld [vmem:[#allocation5] sm:$0xff]
        %v270 = vld [vmem:[#allocation5 + $0x8] sm:$0xf]
        %v271 = vld [vmem:[#allocation5 + $0xc] sm:$0xff]
        %v272 = vld [vmem:[#allocation5 + $0x14] sm:$0xf]
        %v273 = vld [vmem:[#allocation5 + $0x18] sm:$0xff]
        %v274 = vld [vmem:[#allocation5 + $0x20] sm:$0xf]
        %v275 = vld [vmem:[#allocation5 + $0x24] sm:$0xff]
        %v276 = vld [vmem:[#allocation5 + $0x2c] sm:$0xf]
        %v277 = vld [vmem:[#allocation5 + $0x30] sm:$0xff]
        %v278 = vld [vmem:[#allocation5 + $0x38] sm:$0xf]
        %v279 = vld [vmem:[#allocation5 + $0x3c] sm:$0xff]
        %v280 = vld [vmem:[#allocation5 + $0x44] sm:$0xf]
        %v281 = vld [vmem:[%s225] sm:$0xff]
        %v282 = vld [vmem:[%s225 + $0x8] sm:$0xff]
        %v283 = vld [vmem:[%s225 + $0x10] sm:$0xff]
        %v284 = vld [vmem:[%s225 + $0x18] sm:$0xff]
        %v285 = vld [vmem:[%s225 + $0x20] sm:$0xff]
        %v286 = vld [vmem:[%s225 + $0x28] sm:$0xff]
        %v287 = vld [vmem:[%s225 + $0x30] sm:$0xff]
        %v288 = vld [vmem:[%s225 + $0x38] sm:$0xff]
        %v289 = vld [vmem:[%s225 + $0x40] sm:$0xff]
        %v290 = vld [vmem:[%s225 + $0x48] sm:$0xff]
        %v291 = vld [vmem:[%s225 + $0x50] sm:$0xff]
        %v292 = vld [vmem:[%s225 + $0x58] sm:$0xff]
        %v293 = vld [vmem:[%s225 + $0x60] sm:$0xff]
        %v294 = vld [vmem:[%s225 + $0x68] sm:$0xff]
        %v295 = vld [vmem:[%s225 + $0x70] sm:$0xff]
        %v296 = vld [vmem:[%s225 + $0x78] sm:$0xff]
        %v297 = vld [vmem:[%s225 + $0x80] sm:$0xff]
        %v298 = vld [vmem:[%s225 + $0x88] sm:$0xff]
        %v299 = vld [vmem:[%s225 + $0x90] sm:$0xff]
        %v300 = vld [vmem:[%s225 + $0x98] sm:$0xff]
        %v301 = vld [vmem:[%s225 + $0xa0] sm:$0xff]
        %v302 = vld [vmem:[%s225 + $0xa8] sm:$0xff]
        %v303 = vld [vmem:[%s225 + $0xb0] sm:$0xff]
        %v304 = vld [vmem:[%s225 + $0xb8] sm:$0xff]
        %v305 = vld [vmem:[%s225 + $0xc0] sm:$0xff]
        %v306 = vld [vmem:[%s225 + $0xc8] sm:$0xff]
        %v307 = vld [vmem:[%s225 + $0xd0] sm:$0xff]
        %v308 = vld [vmem:[%s225 + $0xd8] sm:$0xff]
        %v309 = vld [vmem:[%s225 + $0xe0] sm:$0xff]
        %v310 = vld [vmem:[%s225 + $0xe8] sm:$0xff]
        %v311 = vld [vmem:[%s225 + $0xf0] sm:$0xff]
        %v312 = vld [vmem:[%s225 + $0xf8] sm:$0xff]
        %v313 = vld [vmem:[%s225 + $0x100] sm:$0xff]
        %v314 = vld [vmem:[%s225 + $0x108] sm:$0xff]
        %v315 = vld [vmem:[%s225 + $0x110] sm:$0xff]
        %v316 = vld [vmem:[%s225 + $0x118] sm:$0xff]
        %v317 = vld [vmem:[%s2] sm:$0xff]
        %v318 = vld [vmem:[%s2 + $0x8] sm:$0xff]
        %v319 = vld [vmem:[%s2 + $0x10] sm:$0xff]
        %v320 = vld [vmem:[%s2 + $0x18] sm:$0xff]
        %v321 = vld [vmem:[%s2 + $0x20] sm:$0xff]
        %v322 = vld [vmem:[%s2 + $0x28] sm:$0xff]
        %324 = vset.pattern.permute.xlu0 0
        %325 = vperm.xlu0 %324, %v317
        %v326 = vpop.permute.xlu0 %325
        %329 = vset.pattern.permute.xlu0 0
        %330 = vperm.xlu0 %329, %v318
        %v331 = vpop.permute.xlu0 %330
        %334 = vset.pattern.permute.xlu0 0
        %335 = vperm.xlu0 %334, %v319
        %v336 = vpop.permute.xlu0 %335
        %339 = vset.pattern.permute.xlu0 0
        %340 = vperm.xlu0 %339, %v320
        %v341 = vpop.permute.xlu0 %340
        %344 = vset.pattern.permute.xlu0 0
        %345 = vperm.xlu0 %344, %v321
        %v346 = vpop.permute.xlu0 %345
        %349 = vset.pattern.permute.xlu0 0
        %350 = vperm.xlu0 %349, %v322
        %v351 = vpop.permute.xlu0 %350
        %v365 = vunpack.c.l.b16 %v269
        %v366 = vunpack.c.h.b16 %v269
        %v367 = vunpack.c.l.b16 %v270
        %v368 = vunpack.c.l.b16 %v271
        %v369 = vunpack.c.h.b16 %v271
        %v370 = vunpack.c.l.b16 %v272
        %v371 = vunpack.c.l.b16 %v273
        %v372 = vunpack.c.h.b16 %v273
        %v373 = vunpack.c.l.b16 %v274
        %v374 = vunpack.c.l.b16 %v275
        %v375 = vunpack.c.h.b16 %v275
        %v376 = vunpack.c.l.b16 %v276
        %v377 = vunpack.c.l.b16 %v277
        %v378 = vunpack.c.h.b16 %v277
        %v379 = vunpack.c.l.b16 %v278
        %v380 = vunpack.c.l.b16 %v279
        %v381 = vunpack.c.h.b16 %v279
        %v382 = vunpack.c.l.b16 %v280
        %v383 = vpack.c.b16 %v368, %v365
        %v384 = vpack.c.b16 %v369, %v366
        %v385 = vpack.c.b16 %v370, %v367
        %v386 = vpack.c.b16 %v374, %v371
        %v387 = vpack.c.b16 %v375, %v372
        %v388 = vpack.c.b16 %v376, %v373
        %v389 = vpack.c.b16 %v380, %v377
        %v390 = vpack.c.b16 %v381, %v378
        %v391 = vpack.c.b16 %v382, %v379
        %v434 = vunpack.c.l.b16 %v281
        %v435 = vunpack.c.h.b16 %v281
        %v436 = vunpack.c.l.b16 %v282
        %v437 = vunpack.c.h.b16 %v282
        %v438 = vunpack.c.l.b16 %v283
        %v439 = vunpack.c.h.b16 %v283
        %v440 = vunpack.c.l.b16 %v284
        %v441 = vunpack.c.h.b16 %v284
        %v442 = vunpack.c.l.b16 %v285
        %v443 = vunpack.c.h.b16 %v285
        %v444 = vunpack.c.l.b16 %v286
        %v445 = vunpack.c.h.b16 %v286
        %v446 = vunpack.c.l.b16 %v287
        %v447 = vunpack.c.h.b16 %v287
        %v448 = vunpack.c.l.b16 %v288
        %v449 = vunpack.c.h.b16 %v288
        %v450 = vunpack.c.l.b16 %v289
        %v451 = vunpack.c.h.b16 %v289
        %v452 = vunpack.c.l.b16 %v290
        %v453 = vunpack.c.h.b16 %v290
        %v454 = vunpack.c.l.b16 %v291
        %v455 = vunpack.c.h.b16 %v291
        %v456 = vunpack.c.l.b16 %v292
        %v457 = vunpack.c.h.b16 %v292
        %v458 = vunpack.c.l.b16 %v293
        %v459 = vunpack.c.h.b16 %v293
        %v460 = vunpack.c.l.b16 %v294
        %v461 = vunpack.c.h.b16 %v294
        %v462 = vunpack.c.l.b16 %v295
        %v463 = vunpack.c.h.b16 %v295
        %v464 = vunpack.c.l.b16 %v296
        %v465 = vunpack.c.h.b16 %v296
        %v466 = vunpack.c.l.b16 %v297
        %v467 = vunpack.c.h.b16 %v297
        %v468 = vunpack.c.l.b16 %v298
        %v469 = vunpack.c.h.b16 %v298
        %v470 = vunpack.c.l.b16 %v299
        %v471 = vunpack.c.h.b16 %v299
        %v472 = vunpack.c.l.b16 %v300
        %v473 = vunpack.c.h.b16 %v300
        %v474 = vunpack.c.l.b16 %v301
        %v475 = vunpack.c.h.b16 %v301
        %v476 = vunpack.c.l.b16 %v302
        %v477 = vunpack.c.h.b16 %v302
        %v478 = vunpack.c.l.b16 %v303
        %v479 = vunpack.c.h.b16 %v303
        %v480 = vunpack.c.l.b16 %v304
        %v481 = vunpack.c.h.b16 %v304
        %v482 = vunpack.c.l.b16 %v305
        %v483 = vunpack.c.h.b16 %v305
        %v484 = vunpack.c.l.b16 %v306
        %v485 = vunpack.c.h.b16 %v306
        %v486 = vunpack.c.l.b16 %v307
        %v487 = vunpack.c.h.b16 %v307
        %v488 = vunpack.c.l.b16 %v308
        %v489 = vunpack.c.h.b16 %v308
        %v490 = vunpack.c.l.b16 %v309
        %v491 = vunpack.c.h.b16 %v309
        %v492 = vunpack.c.l.b16 %v310
        %v493 = vunpack.c.h.b16 %v310
        %v494 = vunpack.c.l.b16 %v311
        %v495 = vunpack.c.h.b16 %v311
        %v496 = vunpack.c.l.b16 %v312
        %v497 = vunpack.c.h.b16 %v312
        %v498 = vunpack.c.l.b16 %v313
        %v499 = vunpack.c.h.b16 %v313
        %v500 = vunpack.c.l.b16 %v314
        %v501 = vunpack.c.h.b16 %v314
        %v502 = vunpack.c.l.b16 %v315
        %v503 = vunpack.c.h.b16 %v315
        %v504 = vunpack.c.l.b16 %v316
        %v505 = vunpack.c.h.b16 %v316
        %v506 = vpack.c.b16 %v436, %v434
        %v507 = vpack.c.b16 %v437, %v435
        %v508 = vpack.c.b16 %v440, %v438
        %v509 = vpack.c.b16 %v441, %v439
        %v510 = vpack.c.b16 %v444, %v442
        %v511 = vpack.c.b16 %v445, %v443
        %v512 = vpack.c.b16 %v448, %v446
        %v513 = vpack.c.b16 %v449, %v447
        %v514 = vpack.c.b16 %v452, %v450
        %v515 = vpack.c.b16 %v453, %v451
        %v516 = vpack.c.b16 %v456, %v454
        %v517 = vpack.c.b16 %v457, %v455
        %v518 = vpack.c.b16 %v460, %v458
        %v519 = vpack.c.b16 %v461, %v459
        %v520 = vpack.c.b16 %v464, %v462
        %v521 = vpack.c.b16 %v465, %v463
        %v522 = vpack.c.b16 %v468, %v466
        %v523 = vpack.c.b16 %v469, %v467
        %v524 = vpack.c.b16 %v472, %v470
        %v525 = vpack.c.b16 %v473, %v471
        %v526 = vpack.c.b16 %v476, %v474
        %v527 = vpack.c.b16 %v477, %v475
        %v528 = vpack.c.b16 %v480, %v478
        %v529 = vpack.c.b16 %v481, %v479
        %v530 = vpack.c.b16 %v484, %v482
        %v531 = vpack.c.b16 %v485, %v483
        %v532 = vpack.c.b16 %v488, %v486
        %v533 = vpack.c.b16 %v489, %v487
        %v534 = vpack.c.b16 %v492, %v490
        %v535 = vpack.c.b16 %v493, %v491
        %v536 = vpack.c.b16 %v496, %v494
        %v537 = vpack.c.b16 %v497, %v495
        %v538 = vpack.c.b16 %v500, %v498
        %v539 = vpack.c.b16 %v501, %v499
        %v540 = vpack.c.b16 %v504, %v502
        %v541 = vpack.c.b16 %v505, %v503
        %vm578 = vcmask 261120
        %v580 = vsel %vm578, %v385, 0
        %v583 = vsel %vm578, %v388, 0
        %v586 = vsel %vm578, %v391, 0
        %588 = vmatprep.subr.bf16.mxu0 %v507
        %589 = vmatpush1.bf16.msra.mxu0 %v506
        %590 = vmatprep.subr.bf16.mxu0 %v509
        %591 = vmatpush1.bf16.msra.mxu0 %v508
        %592 = vmatprep.subr.bf16.mxu0 %v511
        %593 = vmatpush1.bf16.msra.mxu0 %v510
        %594 = vmatprep.subr.bf16.mxu0 %v513
        %595 = vmatpush1.bf16.msra.mxu0 %v512
        %596 = vmatprep.subr.bf16.mxu0 %v515
        %597 = vmatpush1.bf16.msra.mxu0 %v514
        %598 = vmatprep.subr.bf16.mxu0 %v517
        %599 = vmatpush1.bf16.msra.mxu0 %v516
        %600 = vmatprep.subr.bf16.mxu0 %v519
        %601 = vmatpush1.bf16.msra.mxu0 %v518
        %602 = vmatprep.subr.bf16.mxu0 %v521
        %603 = vmatpush1.bf16.msra.mxu0 %v520
        %604 = vmatprep.subr.bf16.mxu0 %v523
        %605 = vmatpush1.bf16.msra.mxu0 %v522
        %606 = vmatprep.subr.bf16.mxu0 %v525
        %607 = vmatpush1.bf16.msra.mxu0 %v524
        %608 = vmatprep.subr.bf16.mxu0 %v527
        %609 = vmatpush1.bf16.msra.mxu0 %v526
        %610 = vmatprep.subr.bf16.mxu0 %v529
        %611 = vmatpush1.bf16.msra.mxu0 %v528
        %612 = vmatprep.subr.bf16.mxu0 %v531
        %613 = vmatpush1.bf16.msra.mxu0 %v530
        %614 = vmatprep.subr.bf16.mxu0 %v533
        %615 = vmatpush1.bf16.msra.mxu0 %v532
        %616 = vmatprep.subr.bf16.mxu0 %v535
        %617 = vmatpush1.bf16.msra.mxu0 %v534
        %618 = vmatprep.subr.bf16.mxu0 %v537
        %619 = vmatpush1.bf16.msra.mxu0 %v536
        %620 = vmatprep.mubr.bf16.mxu0 %v384
        %621 = vmatmul.mubr.bf16.gmra.mrb[0].mxu0 %v383
        %v622 = vpop.f32.mrb[0].mxu0
        %v623 = vadd.f32 %v326, %v622
        %v624 = vpop.f32.mrb[0].mxu0
        %v625 = vadd.f32 %v326, %v624
        %v626 = vpop.f32.mrb[0].mxu0
        %v627 = vadd.f32 %v331, %v626
        %v628 = vpop.f32.mrb[0].mxu0
        %v629 = vadd.f32 %v331, %v628
        %630 = vmatprep.mubr.bf16.mxu0 %v387
        %631 = vmatmul.mubr.bf16.gmra.mrb[0].mxu0 %v386
        %v632 = vpop.f32.mrb[0].mxu0
        %v633 = vadd.f32 %v336, %v632
        %v634 = vpop.f32.mrb[0].mxu0
        %v635 = vadd.f32 %v336, %v634
        %v636 = vpop.f32.mrb[0].mxu0
        %v637 = vadd.f32 %v341, %v636
        %v638 = vpop.f32.mrb[0].mxu0
        %v639 = vadd.f32 %v341, %v638
        %640 = vmatprep.mubr.bf16.mxu0 %v390
        %641 = vmatmul.mubr.bf16.gmra.mrb[0].mxu0 %v389
        %v642 = vpop.f32.mrb[0].mxu0
        %v643 = vadd.f32 %v346, %v642
        %v644 = vpop.f32.mrb[0].mxu0
        %v645 = vadd.f32 %v346, %v644
        %v646 = vpop.f32.mrb[0].mxu0
        %v647 = vadd.f32 %v351, %v646
        %v648 = vpop.f32.mrb[0].mxu0
        %v649 = vadd.f32 %v351, %v648
        %650 = vdwg.mxu0
        %651 = vmatprep.subr.bf16.mxu0 %v539
        %652 = vmatpush1.bf16.msra.mxu0 %v538
        %653 = vmatprep.subr.bf16.mxu0 %v541
        %654 = vmatpush1.bf16.msra.mxu0 %v540
        %655 = vmatprep.subr.bf16.mxu0 0
        %656 = vmatpush1.bf16.msra.mxu0 0
        %657 = vmatprep.subr.bf16.mxu0 0
        %658 = vmatpush1.bf16.msra.mxu0 0
        %659 = vmatprep.subr.bf16.mxu0 0
        %660 = vmatpush1.bf16.msra.mxu0 0
        %661 = vmatprep.subr.bf16.mxu0 0
        %662 = vmatpush1.bf16.msra.mxu0 0
        %663 = vmatprep.subr.bf16.mxu0 0
        %664 = vmatpush1.bf16.msra.mxu0 0
        %665 = vmatprep.subr.bf16.mxu0 0
        %666 = vmatpush1.bf16.msra.mxu0 0
        %667 = vmatprep.subr.bf16.mxu0 0
        %668 = vmatpush1.bf16.msra.mxu0 0
        %669 = vmatprep.subr.bf16.mxu0 0
        %670 = vmatpush1.bf16.msra.mxu0 0
        %671 = vmatprep.subr.bf16.mxu0 0
        %672 = vmatpush1.bf16.msra.mxu0 0
        %673 = vmatprep.subr.bf16.mxu0 0
        %674 = vmatpush1.bf16.msra.mxu0 0
        %675 = vmatprep.subr.bf16.mxu0 0
        %676 = vmatpush1.bf16.msra.mxu0 0
        %677 = vmatprep.subr.bf16.mxu0 0
        %678 = vmatpush1.bf16.msra.mxu0 0
        %679 = vmatprep.subr.bf16.mxu0 0
        %680 = vmatpush1.bf16.msra.mxu0 0
        %681 = vmatprep.subr.bf16.mxu0 0
        %682 = vmatpush1.bf16.msra.mxu0 0
        %683 = vmatprep.mubr.bf16.mxu0 0
        %684 = vmatmul.mubr.bf16.gmra.mrb[0].mxu0 %v580
        %v685 = vpop.f32.mrb[0].mxu0
        %v686 = vadd.f32 %v623, %v685
        %v687 = vpop.f32.mrb[0].mxu0
        %v688 = vadd.f32 %v625, %v687
        %v689 = vpop.f32.mrb[0].mxu0
        %v690 = vadd.f32 %v627, %v689
        %v691 = vpop.f32.mrb[0].mxu0
        %v692 = vadd.f32 %v629, %v691
        %693 = vmatprep.mubr.bf16.mxu0 0
        %694 = vmatmul.mubr.bf16.gmra.mrb[0].mxu0 %v583
        %v695 = vpop.f32.mrb[0].mxu0
        %v696 = vadd.f32 %v633, %v695
        %v697 = vpop.f32.mrb[0].mxu0
        %v698 = vadd.f32 %v635, %v697
        %v699 = vpop.f32.mrb[0].mxu0
        %v700 = vadd.f32 %v637, %v699
        %v701 = vpop.f32.mrb[0].mxu0
        %v702 = vadd.f32 %v639, %v701
        %703 = vmatprep.mubr.bf16.mxu0 0
        %704 = vmatmul.mubr.bf16.gmra.mrb[0].mxu0 %v586
        %v705 = vpop.f32.mrb[0].mxu0
        %v706 = vadd.f32 %v643, %v705
        %v707 = vpop.f32.mrb[0].mxu0
        %v708 = vadd.f32 %v645, %v707
        %v709 = vpop.f32.mrb[0].mxu0
        %v710 = vadd.f32 %v647, %v709
        %v711 = vpop.f32.mrb[0].mxu0
        %v712 = vadd.f32 %v649, %v711
        %713 = vdwg.mxu0
        %v714 = vxor.u32 %v686, 2147483648
        %v715 = vxor.u32 %v688, 2147483648
        %v716 = vxor.u32 %v690, 2147483648
        %v717 = vxor.u32 %v692, 2147483648
        %v718 = vmul.f32 %v714, 1.442695
        %v719 = vpow.pop %v718
        %v720 = vmul.f32 %v715, 1.442695
        %v721 = vpow.pop %v720
        %v722 = vmul.f32 %v716, 1.442695
        %v723 = vpow.pop %v722
        %v724 = vmul.f32 %v717, 1.442695
        %v725 = vpow.pop %v724
        %v726 = vadd.f32 %v719, 1.0
        %v727 = vadd.f32 %v721, 1.0
        %v728 = vadd.f32 %v723, 1.0
        %v729 = vadd.f32 %v725, 1.0
        %v730 = vrcp.pop %v726
        %v731 = vmul.f32 1.0, %v730
        %v732 = vrcp.pop %v727
        %v733 = vmul.f32 1.0, %v732
        %v734 = vrcp.pop %v728
        %v735 = vmul.f32 1.0, %v734
        %v736 = vrcp.pop %v729
        %v737 = vmul.f32 1.0, %v736
        %v738 = vxor.u32 %v696, 2147483648
        %v739 = vxor.u32 %v698, 2147483648
        %v740 = vxor.u32 %v700, 2147483648
        %v741 = vxor.u32 %v702, 2147483648
        %v742 = vmul.f32 %v738, 1.442695
        %v743 = vpow.pop %v742
        %v744 = vmul.f32 %v739, 1.442695
        %v745 = vpow.pop %v744
        %v746 = vmul.f32 %v740, 1.442695
        %v747 = vpow.pop %v746
        %v748 = vmul.f32 %v741, 1.442695
        %v749 = vpow.pop %v748
        %v750 = vadd.f32 %v743, 1.0
        %v751 = vadd.f32 %v745, 1.0
        %v752 = vadd.f32 %v747, 1.0
        %v753 = vadd.f32 %v749, 1.0
        %v754 = vrcp.pop %v750
        %v755 = vmul.f32 1.0, %v754
        %v756 = vrcp.pop %v751
        %v757 = vmul.f32 1.0, %v756
        %v758 = vrcp.pop %v752
        %v759 = vmul.f32 1.0, %v758
        %v760 = vrcp.pop %v753
        %v761 = vmul.f32 1.0, %v760
        %v762 = vtanh.pop %v706
        %v763 = vtanh.pop %v708
        %v764 = vtanh.pop %v710
        %v765 = vtanh.pop %v712
        %v766 = vld [vmem:[%s238] sm:$0xff]
        %v767 = vld [vmem:[%s238 + $0x8] sm:$0xff]
        %v768 = vld [vmem:[%s238 + $0x10] sm:$0xff]
        %v769 = vld [vmem:[%s238 + $0x18] sm:$0xff]
        %v770 = vmul.f32 %v731, %v766
        %v771 = vmul.f32 %v733, %v767
        %v772 = vmul.f32 %v735, %v768
        %v773 = vmul.f32 %v737, %v769
        %v774 = vsub.f32 1.0, %v755
        %v775 = vsub.f32 1.0, %v757
        %v776 = vsub.f32 1.0, %v759
        %v777 = vsub.f32 1.0, %v761
        %v778 = vmul.f32 %v770, %v774
        %v779 = vmul.f32 %v771, %v775
        %v780 = vmul.f32 %v772, %v776
        %v781 = vmul.f32 %v773, %v777
        %v782 = vmul.f32 %v755, %v762
        %v783 = vmul.f32 %v757, %v763
        %v784 = vmul.f32 %v759, %v764
        %v785 = vmul.f32 %v761, %v765
        %v786 = vadd.f32 %v778, %v782
        %v787 = vadd.f32 %v779, %v783
        %v788 = vadd.f32 %v780, %v784
        %v789 = vadd.f32 %v781, %v785
        %790 = vst [vmem:[%s267] sm:$0xff] %v786
        %791 = vst [vmem:[%s267 + $0x8] sm:$0xff] %v787
        %792 = vst [vmem:[%s267 + $0x10] sm:$0xff] %v788
        %793 = vst [vmem:[%s267 + $0x18] sm:$0xff] %v789
        %s794 = sand.u32 %s124, 1
        %s795 = scalar_lea.sflag [#allocation4], %s794
        %s796 = sand.u32 %s124, 1
        %s797 = smul.addr %s796, 32
        %s798 = scalar_lea.vmem [#allocation8], %s797
        // Predicated region
        $region49: #{tpu_custom_call.1} parent=35 // pred_check
          %p799 = pneg %p134
        $region50: #{tpu_custom_call.1} parent=35 // pred_check_branch
          %801 = sbr.rel (%p799) target = $region52
        $region51: #{tpu_custom_call.1} parent=35 // pred_region
          %s803 = ssub.s32 512, 512
          %804 = vsyncadd %s795, %s803
          %s805 = smul.addr %s22, 4
          %s806 = smul.addr %s805, 128
          %s807 = scalar_lea.hbm %s4, %s806
          %s808 = sshll.u32 %s798, 4
          %s809 = int_to_ptr.vmem [resolvable:$true] %s808
          %814 = dma.vmem_to_hbm [thread:$0]  %s809, 512, %s807, %s795, 256, 256, 16
        $region52: #{tpu_custom_call.1} parent=35 // pred_fallthru
          _
      $region36: #{tpu_custom_call.1} parent=5 // pred_fallthru
        _
      %p815 = scmp.le.s32.totalorder 2, %s17
      // Predicated region
      $region53: #{tpu_custom_call.1} parent=5 // pred_check
        %p816 = pneg %p815
      $region54: #{tpu_custom_call.1} parent=5 // pred_check_branch
        %818 = sbr.rel (%p816) target = $region56
      $region55: #{tpu_custom_call.1} parent=5 // pred_region
        %s819 = ssub.s32 %s17, 2
        // Predicated region
        $region57: #{tpu_custom_call.1} parent=55 // pred_check
          %p820 = pneg %p140
        $region58: #{tpu_custom_call.1} parent=55 // pred_check_branch
          %822 = sbr.rel (%p820) target = $region60
        $region59: #{tpu_custom_call.1} parent=55 // pred_region
          %s823 = sand.u32 %s125, 1
          %s824 = scalar_lea.sflag [#allocation4], %s823
          %s825 = sand.u32 %s125, 1
          %s826 = smul.addr %s825, 32
          %s827 = scalar_lea.vmem [#allocation8], %s826
          %828 = dma.done %s824, 512
        $region60: #{tpu_custom_call.1} parent=55 // pred_fallthru
          _
      $region56: #{tpu_custom_call.1} parent=5 // pred_fallthru
        _
    $region6: #{tpu_custom_call.1} parent=1 // loop_footer
      %s21 = sadd.s32 1, %s17
    $region7: #{tpu_custom_call.1} parent=1 // loop_footer_branch
      %16 = sbr.rel target = $region3
    $region8: #{tpu_custom_call.1} parent=1 // loop_exit
      _
    %829 = vsyncpa [#allocation3], 1
    %s830 = scalar_lea.sflag [#allocation3], 1
    %831 = vsyncpa %s830, 1
    %832 = vsyncpa [#allocation6], 1
    %833 = vsyncpa [#allocation4], 1
    %s834 = scalar_lea.sflag [#allocation4], 1
    %835 = vsyncpa %s834, 1

</llo_original>
